<compile_context>
chip_gen: v7x
topology: tpu7x:2x2x1
jax: 0.10.0
libtpu: 0.0.40
codegen_flags: <defaults>
</compile_context>

<pallas_src>
import functools

import jax
import jax.numpy as jnp
from jax import lax
from jax.experimental import pallas as pl
from jax.experimental.pallas import tpu as pltpu


def _vmem_limit_bytes():
    # v7x has 64 MiB VMEM per TensorCore, v5e/v6e have 128 MiB.  Request ~3/4
    # of physical so the compiler keeps headroom for its own scratch and the
    # double buffers (perf feedback: never ask for all of VMEM on v7x).
    try:
        cap = int(pltpu.get_tpu_info().vmem_capacity_bytes)
        if cap > 0:
            return (cap * 3) // 4
    except Exception:
        pass
    return 48 * 1024 * 1024


# ----------------------------------------------------------------------------
# Kernel A: per-metapath projection precompute.  grid = (M,)
#   h   (N, FIN)  bf16, resident (block index constant)
#   W   (FIN, HD) bf16 per metapath
#   alb (H, HD)   f32 block-structured attn_l
# outputs:
#   feat (N, HD)  bf16   projected source/dst features
#   el   (H, N)   f32    el[h, j] = <feat[j, hD:(h+1)D], a_l[h]>
# TODO(synk): for very large N*FIN, row-tile this pass as well.
# ----------------------------------------------------------------------------
def _project_kernel(h_ref, w_ref, al_ref, feat_ref, el_ref):
    feat = jnp.dot(h_ref[...], w_ref[...],
                   preferred_element_type=jnp.float32)            # (N, HD) f32
    el = lax.dot_general(al_ref[...], feat, (((1,), (1,)), ((), ())),
                         preferred_element_type=jnp.float32)      # (H, N)
    feat_ref[...] = feat.astype(feat_ref.dtype)
    el_ref[...] = el


def project_all_metapaths(h_bf16, Wg_bf16, al_blk, *, heads, dout):
    N, FIN = h_bf16.shape
    M = Wg_bf16.shape[0]
    HD = heads * dout
    cost = pl.CostEstimate(
        flops=int(M * (2 * N * FIN * HD + 2 * heads * HD * N)),
        transcendentals=0,
        bytes_accessed=int(M * (N * FIN * 2 + FIN * HD * 2 + heads * HD * 4
                                + N * HD * 2 + heads * N * 4)),
    )
    return pl.pallas_call(
        _project_kernel,
        out_shape=(jax.ShapeDtypeStruct((M, N, HD), jnp.bfloat16),
                   jax.ShapeDtypeStruct((M, heads, N), jnp.float32)),
        grid=(M,),
        in_specs=[
            pl.BlockSpec((N, FIN), lambda m: (0, 0)),              # h (resident)
            pl.BlockSpec((None, FIN, HD), lambda m: (m, 0, 0)),    # W per metapath
            pl.BlockSpec((None, heads, HD), lambda m: (m, 0, 0)),  # attn_l block mat
        ],
        out_specs=(
            pl.BlockSpec((None, N, HD), lambda m: (m, 0, 0)),
            pl.BlockSpec((None, heads, N), lambda m: (m, 0, 0)),
        ),
        compiler_params=pltpu.CompilerParams(
            dimension_semantics=("parallel",),
            vmem_limit_bytes=_vmem_limit_bytes()),
        cost_estimate=cost,
    )(h_bf16, Wg_bf16, al_blk)


# ----------------------------------------------------------------------------
# Kernel B: masked edge softmax + aggregation per metapath, tiled over
# destination-node rows.  grid = (M, N // TN).
#   feat (N, HD)  bf16 resident per metapath
#   el   (H, N)   f32  resident per metapath (precomputed)
#   arb  (H, HD)  bf16 block-structured attn_r
#   bias (1, HD)  f32
#   adj  (TN, N)  int8 edge mask (row = destination node)
#   out  (TN, HD) f32
# ----------------------------------------------------------------------------
def _gat_kernel(feat_ref, el_ref, ar_ref, bias_ref, adj_ref, out_ref, *,
                num_heads, out_feats, negative_slope):
    tn = out_ref.shape[0]
    i0 = pl.multiple_of(pl.program_id(1) * tn, tn)

    feat_src = feat_ref[...]                                 # (N, HD) bf16
    feat_dst = feat_ref[pl.ds(i0, tn), :]                    # (TN, HD) bf16
    # Tiny per-tile matmul: er[h, i] = <feat_dst[i], a_r[h]>  (H rows only).
    er = lax.dot_general(ar_ref[...], feat_dst, (((1,), (1,)), ((), ())),
                         preferred_element_type=jnp.float32)  # (H, TN)
    el = el_ref[...]                                          # (H, N) precomputed

    e = er[:, :, None] + el[:, None, :]                 # (H, TN, N): dst i, src j
    e = jnp.maximum(e, negative_slope * e)              # LeakyReLU (slope < 1)
    # Additive mask built ONCE per tile (broadcast over heads).  Keep f32:
    # masking relies on f32 exp underflow of -1e30-shifted logits.
    neg = jnp.where(adj_ref[...] == 0, -1e30, 0.0)      # (TN, N)
    e = e + neg[None, :, :]
    e = e - jnp.max(e, axis=-1, keepdims=True)
    p = jnp.exp(e)                                      # masked entries underflow to 0
    # Deferred softmax normalization: matmul with unnormalized p, rescale the
    # small (TN, D) results.  denom >= 1 (max element contributes exp(0)=1).
    inv = pl.reciprocal(jnp.sum(p, axis=-1, keepdims=True), approx=True)  # (H, TN, 1)
    p16 = p.astype(jnp.bfloat16)

    # Per-head aggregation, ONE lane-dense (TN, HD) store.
    # TODO(synk): for large head counts, a single batched dot_general over the
    # head axis reduces MXU result-FIFO drains (needs feat in (H, N, D)).
    cols = []
    for h in range(num_heads):
        fh = feat_src[:, h * out_feats:(h + 1) * out_feats]           # (N, D)
        acc = jnp.dot(p16[h], fh, preferred_element_type=jnp.float32)  # (TN, D)
        cols.append(acc * inv[h])
    out = jnp.concatenate(cols, axis=-1) + bias_ref[...]               # (TN, HD)
    out = jnp.where(out > 0, out, jnp.exp(jnp.minimum(out, 0.0)) - 1.0)  # ELU
    out_ref[...] = out


def gat_all_metapaths(feat, el, ar_blk, bg, adjs_i8, *, heads, dout,
                      row_tile=128):
    M, N, HD = feat.shape
    # row_tile: 64-128 on v7x (64 MiB VMEM), 128-256 on v5e/v6e; must be a
    # multiple of 32 (int8 sublane tile) or the full N.
    rt = min(row_tile, N)
    assert N % rt == 0 and (rt == N or rt % 32 == 0), (N, rt)
    R = N // rt

    kernel = functools.partial(_gat_kernel, num_heads=heads, out_feats=dout,
                               negative_slope=0.2)
    cost = pl.CostEstimate(
        flops=int(M * (2 * N * N * HD + 8 * heads * N * N + 2 * heads * HD * N)),
        transcendentals=int(M * (heads * N * N + N * HD + heads * N)),
        bytes_accessed=int(M * (N * N * 1 + N * HD * 2 + heads * N * 4
                                + N * HD * 4 + heads * HD * 2 + HD * 4)),
    )
    return pl.pallas_call(
        kernel,
        out_shape=jax.ShapeDtypeStruct((M, N, HD), jnp.float32),
        grid=(M, R),
        in_specs=[
            pl.BlockSpec((None, N, HD), lambda m, r: (m, 0, 0)),      # feat (resident per m)
            pl.BlockSpec((None, heads, N), lambda m, r: (m, 0, 0)),   # el   (resident per m)
            pl.BlockSpec((None, heads, HD), lambda m, r: (m, 0, 0)),  # attn_r block mat
            pl.BlockSpec((None, 1, HD), lambda m, r: (m, 0, 0)),      # bias
            pl.BlockSpec((None, rt, N), lambda m, r: (m, r, 0)),      # int8 adjacency rows
        ],
        out_specs=pl.BlockSpec((None, rt, HD), lambda m, r: (m, r, 0)),
        compiler_params=pltpu.CompilerParams(
            # Both axes are independent; keeping (M, R) grid order keeps feat
            # resident per metapath.  On v7x, verify in the trace that the
            # large R axis (not a tiny/odd M) is the one sharded across TCs.
            dimension_semantics=("parallel", "parallel"),
            vmem_limit_bytes=_vmem_limit_bytes()),
        cost_estimate=cost,
    )(feat, el, ar_blk, bg, adjs_i8)


# ----------------------------------------------------------------------------
# Kernel C: semantic attention over metapaths + predict Linear + log_softmax,
# tiled over node rows.  grid = (N // TN,).
#   z   (M, TN, HD)  per-metapath GAT outputs for this node tile
#   W1  (HD, HID) bf16, b1 (1, HID)    project Linear
#   w2  (1, HID)                       second projection (row vector, no bias)
#   Wp  (HD, C) bf16, bp (1, C)        predict Linear
#   out (TN, C)
# Matches the given module: softmax over the metapath dim PER NODE (dim=1 of
# the stacked (N, M, HD) tensor), not the mean-over-nodes HAN variant.
# ----------------------------------------------------------------------------
def _sem_predict_kernel(z_ref, w1_ref, b1_ref, w2_ref, wp_ref, bp_ref, out_ref):
    M, tn, HD = z_ref.shape
    z = z_ref[...]                                          # (M, TN, HD) f32
    zf = z.reshape(M * tn, HD)                              # leading-dim collapse

    h1 = jnp.tanh(jnp.dot(zf.astype(jnp.bfloat16), w1_ref[...],
                          preferred_element_type=jnp.float32) + b1_ref[...])
    # Width-1 score: VPU multiply + lane reduce (no 1-column MXU matmul).
    s = jnp.sum(h1 * w2_ref[...], axis=-1, keepdims=True)   # (M*TN, 1)
    s = s.reshape(M, tn, 1)

    # softmax over the metapath dim, per node
    s = s - jnp.max(s, axis=0, keepdims=True)
    ex = jnp.exp(s)
    beta = ex / jnp.sum(ex, axis=0, keepdims=True)          # (M, TN, 1)
    agg = jnp.sum(beta * z, axis=0)                         # (TN, HD)

    # predict linear + log_softmax(dim=1)
    logits = jnp.dot(agg.astype(jnp.bfloat16), wp_ref[...],
                     preferred_element_type=jnp.float32) + bp_ref[...]
    shifted = logits - jnp.max(logits, axis=-1, keepdims=True)
    out_ref[...] = shifted - jnp.log(jnp.sum(jnp.exp(shifted), axis=-1,
                                             keepdims=True))


def semantic_predict(z, W1, b1, w2_row, Wp, bp, *, row_tile=256):
    M, N, HD = z.shape
    HID = W1.shape[1]
    C = Wp.shape[1]
    rt = min(row_tile, N)
    assert N % rt == 0 and (rt == N or rt % 8 == 0), (N, rt)
    R = N // rt

    cost = pl.CostEstimate(
        flops=int(2 * M * N * HD * HID + 4 * M * N * HID + 6 * M * N * HD
                  + 2 * N * HD * C),
        transcendentals=int(M * N * HID + M * N + N * C),
        bytes_accessed=int(M * N * HD * 4 + N * C * 4
                           + (HD * HID * 2 + 2 * HID * 4 + HD * C * 2 + C * 4)),
    )
    return pl.pallas_call(
        _sem_predict_kernel,
        out_shape=jax.ShapeDtypeStruct((N, C), jnp.float32),
        grid=(R,),
        in_specs=[
            pl.BlockSpec((M, rt, HD), lambda r: (0, r, 0)),
            pl.BlockSpec((HD, HID), lambda r: (0, 0)),
            pl.BlockSpec((1, HID), lambda r: (0, 0)),
            pl.BlockSpec((1, HID), lambda r: (0, 0)),
            pl.BlockSpec((HD, C), lambda r: (0, 0)),
            pl.BlockSpec((1, C), lambda r: (0, 0)),
        ],
        out_specs=pl.BlockSpec((rt, C), lambda r: (r, 0)),
        compiler_params=pltpu.CompilerParams(
            dimension_semantics=("parallel",),
            vmem_limit_bytes=_vmem_limit_bytes()),
        cost_estimate=cost,
    )(z, W1.astype(jnp.bfloat16), b1, w2_row, Wp.astype(jnp.bfloat16), bp)


# ----------------------------------------------------------------------------
# Full Classification.forward
# ----------------------------------------------------------------------------
def _head_block_matrix(a):
    """(M, H, D) attention vectors -> (M, H, H*D) block matrix so that
    el/er = a_blk @ feat.T gives every head's dot product in one MXU pass."""
    M, H, D = a.shape
    eye = jnp.eye(H, dtype=a.dtype)
    return (a[:, :, None, :] * eye[None, :, :, None]).reshape(M, H, H * D)


def prepare_adjacency(adjs):
    """Dense adjacency -> int8 edge mask.  Call ONCE and reuse across forward
    passes (4x less HBM traffic on the dominant DMA stream than f32).
    # TODO(synk): bit-pack 8 mask entries per byte + in-kernel unpack for 8x more."""
    return (adjs != 0).astype(jnp.int8)


def classification_forward(x, adjs, Wg, al, ar, bg, W1, b1, W2, Wp, bp,
                           *, heads, dout, gat_row_tile=128, sem_row_tile=256):
    adjs_i8 = adjs if adjs.dtype == jnp.int8 else prepare_adjacency(adjs)
    al_blk = _head_block_matrix(al)                          # (M, H, HD) f32
    ar_blk = _head_block_matrix(ar).astype(jnp.bfloat16)     # (M, H, HD) bf16
    feat, el = project_all_metapaths(x.astype(jnp.bfloat16),
                                     Wg.astype(jnp.bfloat16), al_blk,
                                     heads=heads, dout=dout)
    z = gat_all_metapaths(feat, el, ar_blk, bg, adjs_i8,
                          heads=heads, dout=dout, row_tile=gat_row_tile)
    return semantic_predict(z, W1, b1, jnp.transpose(W2), Wp, bp,
                            row_tile=sem_row_tile)


# ----------------------------------------------------------------------------
# Pure-JAX reference (for correctness check)
# ----------------------------------------------------------------------------
def _gat_ref(h, W, al, ar, bias, adj, heads, dout):
    N = h.shape[0]
    feat = h @ W
    featr = feat.reshape(N, heads, dout)
    el = (featr * al[None]).sum(-1)                    # (N, H)
    er = (featr * ar[None]).sum(-1)                    # (N, H)
    e = er[:, None, :] + el[None, :, :]                # (dst, src, H)
    e = jnp.where(e > 0, e, 0.2 * e)
    mask = (adj > 0)[:, :, None]
    e = jnp.where(mask, e, -1e30)
    e = e - e.max(axis=1, keepdims=True)
    p = jnp.exp(e) * mask
    alpha = p / jnp.maximum(p.sum(axis=1, keepdims=True), 1e-30)
    out = jnp.einsum('ijh,jhd->ihd', alpha, featr) + bias.reshape(1, heads, dout)
    out = jnp.where(out > 0, out, jnp.exp(out) - 1.0)
    return out.reshape(N, heads * dout)


def _reference_forward(x, adjs, Wg, al, ar, bg, W1, b1, W2, Wp, bp, heads, dout):
    M = adjs.shape[0]
    z = jnp.stack([_gat_ref(x, Wg[m], al[m], ar[m], bg[m], adjs[m], heads, dout)
                   for m in range(M)], axis=0)         # (M, N, HD)
    s = jnp.stack([jnp.tanh(z[m] @ W1 + b1) @ W2 for m in range(M)], axis=0)
    beta = jax.nn.softmax(s, axis=0)                   # (M, N, 1)
    agg = (beta * z).sum(axis=0)                       # (N, HD)
    logits = agg @ Wp + bp
    return jax.nn.log_softmax(logits, axis=1)


if __name__ == "__main__":
    N, FIN, NHID, HEADS, M, C, SEM_HID = 64, 8, 8, 2, 2, 4, 128
    HD = NHID * HEADS

    key = jax.random.PRNGKey(0)
    keys = jax.random.split(key, 10)

    x = jax.random.normal(keys[0], (N, FIN), jnp.float32)
    adj_rand = (jax.random.uniform(keys[1], (M, N, N)) < 0.2).astype(jnp.float32)
    adjs = jnp.clip(adj_rand + jnp.eye(N, dtype=jnp.float32)[None], 0.0, 1.0)
    adjs_i8 = prepare_adjacency(adjs)   # converted once, reused across calls

    # GATConv params, one set per metapath (DGL inits bias to 0)
    Wg = 0.3 * jax.random.normal(keys[2], (M, FIN, HD), jnp.float32)
    al = 0.3 * jax.random.normal(keys[3], (M, HEADS, NHID), jnp.float32)
    ar = 0.3 * jax.random.normal(keys[4], (M, HEADS, NHID), jnp.float32)
    bg = jnp.zeros((M, 1, HD), jnp.float32)

    # SemanticAttention params
    W1 = 0.2 * jax.random.normal(keys[5], (HD, SEM_HID), jnp.float32)
    b1 = jnp.zeros((1, SEM_HID), jnp.float32)
    W2 = 0.2 * jax.random.normal(keys[6], (SEM_HID, 1), jnp.float32)

    # predict Linear
    Wp = 0.2 * jax.random.normal(keys[7], (HD, C), jnp.float32)
    bp = jnp.zeros((1, C), jnp.float32)

    out = classification_forward(x, adjs_i8, Wg, al, ar, bg, W1, b1, W2, Wp, bp,
                                 heads=HEADS, dout=NHID,
                                 gat_row_tile=128, sem_row_tile=256)
    out = jax.block_until_ready(out)

    ref = _reference_forward(x, adjs, Wg, al, ar, bg, W1, b1, W2, Wp, bp,
                             HEADS, NHID)
    assert out.shape == (N, C)
    # Tolerance accounts for bf16 MXU operands + approx reciprocal in the kernels.
    assert bool(jnp.allclose(out, ref, rtol=5e-2, atol=5e-2)), "mismatch vs reference"
    print("KERNEL_OK")
</pallas_src>

<mosaic_0001>
module attributes {stable_mosaic.version = 11 : i64} {
  func.func @_project_kernel(%arg0: i32, %arg1: memref<64x8xbf16, #tpu.memory_space<vmem>>, %arg2: memref<1x8x16xbf16, #tpu.memory_space<vmem>>, %arg3: memref<1x2x16xf32, #tpu.memory_space<vmem>>, %arg4: memref<1x64x16xbf16, #tpu.memory_space<vmem>>, %arg5: memref<1x2x64xf32, #tpu.memory_space<vmem>>) attributes {dimension_semantics = [#tpu.dimension_semantics<parallel>], iteration_bounds = array<i64: 2>, scalar_prefetch = 0 : i64, scratch_operands = 0 : i64, tpu.core_type = #tpu.core_type<tc>, window_params = [{pipeline_mode = #tpu.pipeline_mode<synchronous>, transform_indices = @transform_0, window_bounds = array<i64: 64, 8>}, {transform_indices = @transform_1, window_bounds = array<i64: 1, 8, 16>}, {transform_indices = @transform_2, window_bounds = array<i64: 1, 2, 16>}, {transform_indices = @transform_3, window_bounds = array<i64: 1, 64, 16>}, {transform_indices = @transform_4, window_bounds = array<i64: 1, 2, 64>}]} {
    %c0 = arith.constant 0 : index
    %c0_0 = arith.constant 0 : index
    %0 = vector.load %arg1[%c0, %c0_0] : memref<64x8xbf16, #tpu.memory_space<vmem>>, vector<64x8xbf16>
    %c0_1 = arith.constant 0 : index
    %c0_2 = arith.constant 0 : index
    %c0_3 = arith.constant 0 : index
    %1 = vector.load %arg2[%c0_1, %c0_2, %c0_3] : memref<1x8x16xbf16, #tpu.memory_space<vmem>>, vector<1x8x16xbf16>
    %2 = vector.shape_cast %1 : vector<1x8x16xbf16> to vector<8x16xbf16>
    %cst = arith.constant dense<0.000000e+00> : vector<64x16xf32>
    %3 = tpu.matmul %0, %2, %cst {dimension_numbers = #tpu.dot_dimension_numbers<[1], [0], [0], [1], [0, 0, 1, 1], [], []>} : vector<64x8xbf16>, vector<8x16xbf16>, vector<64x16xf32> -> vector<64x16xf32>
    %c0_4 = arith.constant 0 : index
    %c0_5 = arith.constant 0 : index
    %c0_6 = arith.constant 0 : index
    %4 = vector.load %arg3[%c0_4, %c0_5, %c0_6] : memref<1x2x16xf32, #tpu.memory_space<vmem>>, vector<1x2x16xf32>
    %5 = vector.shape_cast %4 : vector<1x2x16xf32> to vector<2x16xf32>
    %cst_7 = arith.constant dense<0.000000e+00> : vector<2x64xf32>
    %6 = tpu.matmul %5, %3, %cst_7 {dimension_numbers = #tpu.dot_dimension_numbers<[1], [1], [0], [0], [0, 0, 1, 0], [], []>} : vector<2x16xf32>, vector<64x16xf32>, vector<2x64xf32> -> vector<2x64xf32>
    %7 = arith.truncf %3 : vector<64x16xf32> to vector<64x16xbf16>
    %c0_8 = arith.constant 0 : index
    %c0_9 = arith.constant 0 : index
    %c0_10 = arith.constant 0 : index
    %8 = vector.load %arg4[%c0_8, %c0_9, %c0_10] : memref<1x64x16xbf16, #tpu.memory_space<vmem>>, vector<1x64x16xbf16>
    %9 = vector.shape_cast %8 : vector<1x64x16xbf16> to vector<64x16xbf16>
    %10 = vector.shape_cast %7 : vector<64x16xbf16> to vector<1x64x16xbf16>
    tpu.vector_store %arg4[%c0_8, %c0_9, %c0_10], %10 {strides = array<i32>} : memref<1x64x16xbf16, #tpu.memory_space<vmem>>, vector<1x64x16xbf16>,
    %c0_11 = arith.constant 0 : index
    %c0_12 = arith.constant 0 : index
    %c0_13 = arith.constant 0 : index
    %11 = vector.load %arg5[%c0_11, %c0_12, %c0_13] : memref<1x2x64xf32, #tpu.memory_space<vmem>>, vector<1x2x64xf32>
    %12 = vector.shape_cast %11 : vector<1x2x64xf32> to vector<2x64xf32>
    %13 = vector.shape_cast %6 : vector<2x64xf32> to vector<1x2x64xf32>
    tpu.vector_store %arg5[%c0_11, %c0_12, %c0_13], %13 {strides = array<i32>} : memref<1x2x64xf32, #tpu.memory_space<vmem>>, vector<1x2x64xf32>,
    return
  }
  func.func @transform_0(%arg0: i32) -> (i32, i32) {
    %c0_i32 = arith.constant 0 : i32
    %c0_i32_0 = arith.constant 0 : i32
    %c0_i32_1 = arith.constant 0 : i32
    return %c0_i32, %c0_i32_0 : i32, i32
  }
  func.func @transform_1(%arg0: i32) -> (i32, i32, i32) {
    %c0_i32 = arith.constant 0 : i32
    %c0_i32_0 = arith.constant 0 : i32
    %c0_i32_1 = arith.constant 0 : i32
    return %arg0, %c0_i32, %c0_i32_0 : i32, i32, i32
  }
  func.func @transform_2(%arg0: i32) -> (i32, i32, i32) {
    %c0_i32 = arith.constant 0 : i32
    %c0_i32_0 = arith.constant 0 : i32
    %c0_i32_1 = arith.constant 0 : i32
    return %arg0, %c0_i32, %c0_i32_0 : i32, i32, i32
  }
  func.func @transform_3(%arg0: i32) -> (i32, i32, i32) {
    %c0_i32 = arith.constant 0 : i32
    %c0_i32_0 = arith.constant 0 : i32
    %c0_i32_1 = arith.constant 0 : i32
    return %arg0, %c0_i32, %c0_i32_0 : i32, i32, i32
  }
  func.func @transform_4(%arg0: i32) -> (i32, i32, i32) {
    %c0_i32 = arith.constant 0 : i32
    %c0_i32_0 = arith.constant 0 : i32
    %c0_i32_1 = arith.constant 0 : i32
    return %arg0, %c0_i32, %c0_i32_0 : i32, i32, i32
  }
}

</mosaic_0001>

<llo_original>
// kernel: tpu_custom_call.1
$region0: #{tpu_custom_call.1}
  #allocation0 [shape = 'u32[]', space=smem, size = 0x4, offset = 0x4, fixed_abs, tag = 'smem constant byte address 0x4 - core index']
  #allocation1 [shape = 'u32[144,128]{1,0:T(1,128)}', space=vmem, size = 0x12000, scoped, tag = 'internal scratch']
  %s0 = inlined_call_operand.vmem [shape: bf16[64,8], index: 0, kind: input, shape index: {}]
  %s1 = inlined_call_operand.vmem [shape: bf16[2,8,16], index: 1, kind: input, shape index: {}]
  %s2 = inlined_call_operand.vmem [shape: f32[2,2,16], index: 2, kind: input, shape index: {}]
  %s3 = inlined_call_operand.vmem [shape: bf16[2,64,16], index: 3, kind: output, shape index: {0}]
  %s4 = inlined_call_operand.hbm [shape: f32[2,2,64], index: 4, kind: output, shape index: {1}]
  %5 = xla_tuple %s3, %s4
  %s6 = sld [smem:[#allocation0]]
  $region53: #{tpu_custom_call.1} parent=0
    _
  %s8 = ssub.s32 1, %s6
  %s9 = scalar_select 0, %s8, %s6
  $region1: #{tpu_custom_call.1} parent=0
    #allocation2 [shape = 'u8[2048]{0}', space=vmem, size = 0x800, scoped, tag = 'output window, operand 1']
    #allocation3 [shape = 's32[2]{0}', space=sflag, size = 0x8, scoped, tag = 'scoped memory for tpu_custom_call.1']
    %10 = vsyncpa [#allocation3], 0
    %s11 = scalar_lea.sflag [#allocation3], 1
    %12 = vsyncpa %s11, 0
    loop: start=0, step=1, limit=4
    $region2: #{tpu_custom_call.1} parent=1 // loop_pre_header
      _
    $region3: #{tpu_custom_call.1} parent=1 // loop_header
      %s14 = sphi 0, %s18
      %p15 = scmp.ge.s32.totalorder %s14, 4
      %s22 = sphi 0, %s22
      %s24 = sphi 0, %s22
      %s25 = sphi 0, %s24
      %s39 = sphi 0, %s25
      %s45 = sphi 0, %s47
      %s48 = sphi 0, %s45
      %s49 = sphi 0, %s48
      %s65 = sphi 0, %s49
      %s71 = sphi 0, %s73
      %s74 = sphi 0, %s71
      %s75 = sphi 0, %s74
      %s91 = sphi 0, %s75
      %s97 = sphi 0, %s99
      %s100 = sphi 0, %s97
      %s101 = sphi 0, %s100
      %s117 = sphi 0, %s101
      %s123 = sphi 0, %s125
      %s126 = sphi 0, %s123
      %s127 = sphi 0, %s126
      %s143 = sphi 0, %s127
    $region4: #{tpu_custom_call.1} parent=1 // loop_header_branch
      %17 = sbr.rel (%p15) target = $region8
    $region5: #{tpu_custom_call.1} parent=1 // loop_body
      %s19 = ssub.s32 %s14, 1
      %s20 = ssub.s32 %s14, 2
      %s21 = sadd.s32 %s14, 1
      %s23 = sadd.s32 %s22, 1
      %p26 = scmp.eq.s32.totalorder %s14, 1
      %p27 = scmp.ne.s32.totalorder %s22, %s24
      %p28 = scmp.eq.s32.totalorder %s14, 0
      %p29 = por %p27, %p28
      %p30 = scmp.ne.s32.totalorder %s22, %s24
      %p31 = scmp.eq.s32.totalorder %s19, 1
      %p32 = por %p30, %p31
      %p33 = scmp.ne.s32.totalorder %s24, %s25
      %p34 = scmp.eq.s32.totalorder %s19, 0
      %p35 = por %p33, %p34
      %p36 = scmp.ne.s32.totalorder %s24, %s25
      %p37 = scmp.eq.s32.totalorder %s20, 1
      %p38 = por %p36, %p37
      %p40 = scmp.ne.s32.totalorder %s25, %s39
      %p41 = scmp.eq.s32.totalorder %s20, 0
      %p42 = por %p40, %p41
      %s43 = ssub.s32 %s14, %s21
      %p44 = scmp.eq.s32.totalorder %s43, 0
      %s46 = sadd.s32 %s45, 1
      %s47 = scalar_select %p44, %s45, %s46
      %p50 = pneg %p44
      %p51 = scmp.eq.s32.totalorder %s14, 1
      %p52 = por %p50, %p51
      %p53 = scmp.ne.s32.totalorder %s45, %s48
      %p54 = scmp.eq.s32.totalorder %s14, 0
      %p55 = por %p53, %p54
      %p56 = scmp.ne.s32.totalorder %s45, %s48
      %p57 = scmp.eq.s32.totalorder %s19, 1
      %p58 = por %p56, %p57
      %p59 = scmp.ne.s32.totalorder %s48, %s49
      %p60 = scmp.eq.s32.totalorder %s19, 0
      %p61 = por %p59, %p60
      %p62 = scmp.ne.s32.totalorder %s48, %s49
      %p63 = scmp.eq.s32.totalorder %s20, 1
      %p64 = por %p62, %p63
      %p66 = scmp.ne.s32.totalorder %s49, %s65
      %p67 = scmp.eq.s32.totalorder %s20, 0
      %p68 = por %p66, %p67
      %s69 = ssub.s32 %s14, %s21
      %p70 = scmp.eq.s32.totalorder %s69, 0
      %s72 = sadd.s32 %s71, 1
      %s73 = scalar_select %p70, %s71, %s72
      %p76 = pneg %p70
      %p77 = scmp.eq.s32.totalorder %s14, 1
      %p78 = por %p76, %p77
      %p79 = scmp.ne.s32.totalorder %s71, %s74
      %p80 = scmp.eq.s32.totalorder %s14, 0
      %p81 = por %p79, %p80
      %p82 = scmp.ne.s32.totalorder %s71, %s74
      %p83 = scmp.eq.s32.totalorder %s19, 1
      %p84 = por %p82, %p83
      %p85 = scmp.ne.s32.totalorder %s74, %s75
      %p86 = scmp.eq.s32.totalorder %s19, 0
      %p87 = por %p85, %p86
      %p88 = scmp.ne.s32.totalorder %s74, %s75
      %p89 = scmp.eq.s32.totalorder %s20, 1
      %p90 = por %p88, %p89
      %p92 = scmp.ne.s32.totalorder %s75, %s91
      %p93 = scmp.eq.s32.totalorder %s20, 0
      %p94 = por %p92, %p93
      %s95 = ssub.s32 %s14, %s21
      %p96 = scmp.eq.s32.totalorder %s95, 0
      %s98 = sadd.s32 %s97, 1
      %s99 = scalar_select %p96, %s97, %s98
      %p102 = pneg %p96
      %p103 = scmp.eq.s32.totalorder %s14, 1
      %p104 = por %p102, %p103
      %p105 = scmp.ne.s32.totalorder %s97, %s100
      %p106 = scmp.eq.s32.totalorder %s14, 0
      %p107 = por %p105, %p106
      %p108 = scmp.ne.s32.totalorder %s97, %s100
      %p109 = scmp.eq.s32.totalorder %s19, 1
      %p110 = por %p108, %p109
      %p111 = scmp.ne.s32.totalorder %s100, %s101
      %p112 = scmp.eq.s32.totalorder %s19, 0
      %p113 = por %p111, %p112
      %p114 = scmp.ne.s32.totalorder %s100, %s101
      %p115 = scmp.eq.s32.totalorder %s20, 1
      %p116 = por %p114, %p115
      %p118 = scmp.ne.s32.totalorder %s101, %s117
      %p119 = scmp.eq.s32.totalorder %s20, 0
      %p120 = por %p118, %p119
      %s121 = ssub.s32 %s14, %s21
      %p122 = scmp.eq.s32.totalorder %s121, 0
      %s124 = sadd.s32 %s123, 1
      %s125 = scalar_select %p122, %s123, %s124
      %p128 = pneg %p122
      %p129 = scmp.eq.s32.totalorder %s14, 1
      %p130 = por %p128, %p129
      %p131 = scmp.ne.s32.totalorder %s123, %s126
      %p132 = scmp.eq.s32.totalorder %s14, 0
      %p133 = por %p131, %p132
      %p134 = scmp.ne.s32.totalorder %s123, %s126
      %p135 = scmp.eq.s32.totalorder %s19, 1
      %p136 = por %p134, %p135
      %p137 = scmp.ne.s32.totalorder %s126, %s127
      %p138 = scmp.eq.s32.totalorder %s19, 0
      %p139 = por %p137, %p138
      %p140 = scmp.ne.s32.totalorder %s126, %s127
      %p141 = scmp.eq.s32.totalorder %s20, 1
      %p142 = por %p140, %p141
      %p144 = scmp.ne.s32.totalorder %s127, %s143
      %p145 = scmp.eq.s32.totalorder %s20, 0
      %p146 = por %p144, %p145
      %p147 = scmp.le.s32.totalorder 1, %s14
      %p148 = scmp.lt.s32.totalorder %s14, 3
      %p149 = pnand %p147, %p148
      %p150 = pneg %p149
      // Predicated region
      $region9: #{tpu_custom_call.1} parent=5 // pred_check
        _
      $region10: #{tpu_custom_call.1} parent=5 // pred_check_branch
        %152 = sbr.rel (%p149) target = $region12
      $region11: #{tpu_custom_call.1} parent=5 // pred_region
        %s153 = ssub.s32 %s14, 1
        // Predicated region
        $region13: #{tpu_custom_call.1} parent=11 // pred_check
          %p154 = pneg %p35
        $region14: #{tpu_custom_call.1} parent=11 // pred_check_branch
          %156 = sbr.rel (%p154) target = $region16
        $region15: #{tpu_custom_call.1} parent=11 // pred_region
          _
        $region16: #{tpu_custom_call.1} parent=11 // pred_fallthru
          _
      $region12: #{tpu_custom_call.1} parent=5 // pred_fallthru
        _
      %p157 = scmp.lt.s32.totalorder %s14, 2
      // Predicated region
      $region17: #{tpu_custom_call.1} parent=5 // pred_check
        %p158 = pneg %p157
      $region18: #{tpu_custom_call.1} parent=5 // pred_check_branch
        %160 = sbr.rel (%p158) target = $region20
      $region19: #{tpu_custom_call.1} parent=5 // pred_region
        // Predicated region
        $region21: #{tpu_custom_call.1} parent=19 // pred_check
          %p161 = pneg %p55
        $region22: #{tpu_custom_call.1} parent=19 // pred_check_branch
          %163 = sbr.rel (%p161) target = $region24
        $region23: #{tpu_custom_call.1} parent=19 // pred_region
          %p164 = scmp.lt.s32.totalorder %s14, 1
          %s165 = scalar_select %p164, %s14, 1
          %s166 = smul.addr %s165, 4
          %s167 = scalar_lea.vmem %s1, %s166
        $region24: #{tpu_custom_call.1} parent=19 // pred_fallthru
          _
        // Predicated region
        $region25: #{tpu_custom_call.1} parent=19 // pred_check
          %p168 = pneg %p81
        $region26: #{tpu_custom_call.1} parent=19 // pred_check_branch
          %170 = sbr.rel (%p168) target = $region28
        $region27: #{tpu_custom_call.1} parent=19 // pred_region
          %p171 = scmp.lt.s32.totalorder %s14, 1
          %s172 = scalar_select %p171, %s14, 1
          %s173 = smul.addr %s172, 2
          %s174 = scalar_lea.vmem %s2, %s173
        $region28: #{tpu_custom_call.1} parent=19 // pred_fallthru
          _
      $region20: #{tpu_custom_call.1} parent=5 // pred_fallthru
        _
      %p175 = scmp.le.s32.totalorder 1, %s14
      %p176 = scmp.lt.s32.totalorder %s14, 3
      %p177 = pnand %p175, %p176
      %p178 = pneg %p177
      // Predicated region
      $region29: #{tpu_custom_call.1} parent=5 // pred_check
        _
      $region30: #{tpu_custom_call.1} parent=5 // pred_check_branch
        %180 = sbr.rel (%p177) target = $region32
      $region31: #{tpu_custom_call.1} parent=5 // pred_region
        %s181 = ssub.s32 %s14, 1
        %p182 = pneg %p35
        %p183 = pneg %p32
        %p184 = scmp.lt.s32.totalorder %s19, 1
        %s185 = scalar_select %p184, %s19, 1
        %s186 = smul.addr %s185, 4
        %s187 = scalar_lea.vmem %s1, %s186
        %p188 = pneg %p61
        %p189 = pneg %p58
        %p190 = scmp.lt.s32.totalorder %s19, 1
        %s191 = scalar_select %p190, %s19, 1
        %s192 = smul.addr %s191, 2
        %s193 = scalar_lea.vmem %s2, %s192
        %p194 = pneg %p87
        %p195 = pneg %p84
        %p196 = pneg %p113
        %p197 = pneg %p110
        %p198 = scmp.lt.s32.totalorder %s19, 1
        %s199 = scalar_select %p198, %s19, 1
        %s200 = smul.addr %s199, 8
        %s201 = smul.addr %s200, 4
        %s202 = scalar_lea.vmem %s3, %s201
        %p203 = pneg %p139
        %p204 = pneg %p136
        %s205 = sand.u32 %s126, 1
        %s206 = scalar_lea.sflag [#allocation3], %s205
        %s207 = sand.u32 %s126, 1
        %s208 = smul.addr %s207, 2
        %s209 = scalar_lea.vmem [#allocation2], %s208
        %p210 = scmp.lt.s32.totalorder %s19, 1
        %s211 = scalar_select %p210, %s19, 1
        %s212 = smul.addr %s211, 4
        %s213 = scalar_lea.vmem %s1, %s212
        %p214 = scmp.lt.s32.totalorder %s19, 1
        %s215 = scalar_select %p214, %s19, 1
        %s216 = smul.addr %s215, 2
        %s217 = scalar_lea.vmem %s2, %s216
        %p218 = scmp.lt.s32.totalorder %s19, 1
        %s219 = scalar_select %p218, %s19, 1
        %s220 = smul.addr %s219, 8
        %s221 = smul.addr %s220, 4
        %s222 = scalar_lea.vmem %s3, %s221
        %v224 = vld [vmem:[%s0] sm:$0xf]
        %v225 = vld [vmem:[%s0 + $0x4] sm:$0xf]
        %v226 = vld [vmem:[%s0 + $0x8] sm:$0xf]
        %v227 = vld [vmem:[%s0 + $0xc] sm:$0xf]
        %v228 = vld [vmem:[%s0 + $0x10] sm:$0xf]
        %v229 = vld [vmem:[%s0 + $0x14] sm:$0xf]
        %v230 = vld [vmem:[%s0 + $0x18] sm:$0xf]
        %v231 = vld [vmem:[%s0 + $0x1c] sm:$0xf]
        %v232 = vld [vmem:[%s213] sm:$0xf]
        %v241 = vunpack.c.l.b16 %v224
        %v242 = vunpack.c.l.b16 %v225
        %v243 = vunpack.c.l.b16 %v226
        %v244 = vunpack.c.l.b16 %v227
        %v245 = vunpack.c.l.b16 %v228
        %v246 = vunpack.c.l.b16 %v229
        %v247 = vunpack.c.l.b16 %v230
        %v248 = vunpack.c.l.b16 %v231
        %v249 = vpack.c.b16 %v242, %v241
        %v250 = vpack.c.b16 %v244, %v243
        %v251 = vpack.c.b16 %v246, %v245
        %v252 = vpack.c.b16 %v248, %v247
        %vm253 = vcmask 64512
        %v255 = vsel %vm253, %v249, 0
        %v258 = vsel %vm253, %v250, 0
        %v261 = vsel %vm253, %v251, 0
        %v264 = vsel %vm253, %v252, 0
        %vm266 = vcmask 1043456
        %v268 = vsel %vm266, %v232, 0
        %270 = vmatprep.subr.bf16.mxu0 0
        %271 = vmatpush1.bf16.msra.mxu0 %v268
        %272 = vmatprep.subr.bf16.mxu0 0
        %273 = vmatpush1.bf16.msra.mxu0 0
        %274 = vmatprep.subr.bf16.mxu0 0
        %275 = vmatpush1.bf16.msra.mxu0 0
        %276 = vmatprep.subr.bf16.mxu0 0
        %277 = vmatpush1.bf16.msra.mxu0 0
        %278 = vmatprep.subr.bf16.mxu0 0
        %279 = vmatpush1.bf16.msra.mxu0 0
        %280 = vmatprep.subr.bf16.mxu0 0
        %281 = vmatpush1.bf16.msra.mxu0 0
        %282 = vmatprep.subr.bf16.mxu0 0
        %283 = vmatpush1.bf16.msra.mxu0 0
        %284 = vmatprep.subr.bf16.mxu0 0
        %285 = vmatpush1.bf16.msra.mxu0 0
        %286 = vmatprep.subr.bf16.mxu0 0
        %287 = vmatpush1.bf16.msra.mxu0 0
        %288 = vmatprep.subr.bf16.mxu0 0
        %289 = vmatpush1.bf16.msra.mxu0 0
        %290 = vmatprep.subr.bf16.mxu0 0
        %291 = vmatpush1.bf16.msra.mxu0 0
        %292 = vmatprep.subr.bf16.mxu0 0
        %293 = vmatpush1.bf16.msra.mxu0 0
        %294 = vmatprep.subr.bf16.mxu0 0
        %295 = vmatpush1.bf16.msra.mxu0 0
        %296 = vmatprep.subr.bf16.mxu0 0
        %297 = vmatpush1.bf16.msra.mxu0 0
        %298 = vmatprep.subr.bf16.mxu0 0
        %299 = vmatpush1.bf16.msra.mxu0 0
        %300 = vmatprep.subr.bf16.mxu0 0
        %301 = vmatpush1.bf16.msra.mxu0 0
        %302 = vmatprep.mubr.bf16.mxu0 0
        %303 = vmatmul.mubr.bf16.gmra.mrb[0].mxu0 %v255
        %v304 = vpop.f32.mrb[0].mxu0
        %v305 = vadd.f32 0.0, %v304
        %v306 = vpop.f32.mrb[0].mxu0
        %v307 = vpop.f32.mrb[0].mxu0
        %v308 = vadd.f32 0.0, %v307
        %v309 = vpop.f32.mrb[0].mxu0
        %310 = vmatprep.mubr.bf16.mxu0 0
        %311 = vmatmul.mubr.bf16.gmra.mrb[0].mxu0 %v258
        %v312 = vpop.f32.mrb[0].mxu0
        %v313 = vadd.f32 0.0, %v312
        %v314 = vpop.f32.mrb[0].mxu0
        %v315 = vpop.f32.mrb[0].mxu0
        %v316 = vadd.f32 0.0, %v315
        %v317 = vpop.f32.mrb[0].mxu0
        %318 = vmatprep.mubr.bf16.mxu0 0
        %319 = vmatmul.mubr.bf16.gmra.mrb[0].mxu0 %v261
        %v320 = vpop.f32.mrb[0].mxu0
        %v321 = vadd.f32 0.0, %v320
        %v322 = vpop.f32.mrb[0].mxu0
        %v323 = vpop.f32.mrb[0].mxu0
        %v324 = vadd.f32 0.0, %v323
        %v325 = vpop.f32.mrb[0].mxu0
        %326 = vmatprep.mubr.bf16.mxu0 0
        %327 = vmatmul.mubr.bf16.gmra.mrb[0].mxu0 %v264
        %v328 = vpop.f32.mrb[0].mxu0
        %v329 = vadd.f32 0.0, %v328
        %v330 = vpop.f32.mrb[0].mxu0
        %v331 = vpop.f32.mrb[0].mxu0
        %v332 = vadd.f32 0.0, %v331
        %v333 = vpop.f32.mrb[0].mxu0
        %334 = vdwg.mxu0
        %v335 = vld [vmem:[%s217] sm:$0x3]
        %vm336 = vcmask 130048
        %v338 = vsel %vm336, %v335, 0
        %v341 = vsel %vm336, %v305, 0
        %v344 = vsel %vm336, %v308, 0
        %v347 = vsel %vm336, %v313, 0
        %v350 = vsel %vm336, %v316, 0
        %v353 = vsel %vm336, %v321, 0
        %v356 = vsel %vm336, %v324, 0
        %v359 = vsel %vm336, %v329, 0
        %v362 = vsel %vm336, %v332, 0
        %364 = vmatprep.subr.mxu0 0.0
        %365 = vmatpush1.xpose.msra.mxu0 %v341
        %366 = vmatprep.subr.mxu0 0.0
        %367 = vmatpush1.xpose.msra.mxu0 %v344
        %368 = vmatprep.subr.mxu0 0.0
        %369 = vmatpush1.xpose.msra.mxu0 %v347
        %370 = vmatprep.subr.mxu0 0.0
        %371 = vmatpush1.xpose.msra.mxu0 %v350
        %372 = vmatprep.subr.mxu0 0.0
        %373 = vmatpush1.xpose.msra.mxu0 %v353
        %374 = vmatprep.subr.mxu0 0.0
        %375 = vmatpush1.xpose.msra.mxu0 %v356
        %376 = vmatprep.subr.mxu0 0.0
        %377 = vmatpush1.xpose.msra.mxu0 %v359
        %378 = vmatprep.subr.mxu0 0.0
        %379 = vmatpush1.xpose.msra.mxu0 %v362
        %380 = vmatprep.subr.mxu0 0.0
        %381 = vmatpush1.xpose.msra.mxu0 0.0
        %382 = vmatprep.subr.mxu0 0.0
        %383 = vmatpush1.xpose.msra.mxu0 0.0
        %384 = vmatprep.subr.mxu0 0.0
        %385 = vmatpush1.xpose.msra.mxu0 0.0
        %386 = vmatprep.subr.mxu0 0.0
        %387 = vmatpush1.xpose.msra.mxu0 0.0
        %388 = vmatprep.subr.mxu0 0.0
        %389 = vmatpush1.xpose.msra.mxu0 0.0
        %390 = vmatprep.subr.mxu0 0.0
        %391 = vmatpush1.xpose.msra.mxu0 0.0
        %392 = vmatprep.subr.mxu0 0.0
        %393 = vmatpush1.xpose.msra.mxu0 0.0
        %394 = vmatprep.subr.mxu0 0.0
        %395 = vmatpush1.xpose.msra.mxu0 0.0
        %396 = vmatprep.subr.mxu0 0.0
        %397 = vmatpush1.xpose.msra.mxu0 0.0
        %398 = vmatprep.subr.mxu0 0.0
        %399 = vmatpush1.xpose.msra.mxu0 0.0
        %400 = vmatprep.subr.mxu0 0.0
        %401 = vmatpush1.xpose.msra.mxu0 0.0
        %402 = vmatprep.subr.mxu0 0.0
        %403 = vmatpush1.xpose.msra.mxu0 0.0
        %404 = vmatprep.subr.mxu0 0.0
        %405 = vmatpush1.xpose.msra.mxu0 0.0
        %406 = vmatprep.subr.mxu0 0.0
        %407 = vmatpush1.xpose.msra.mxu0 0.0
        %408 = vmatprep.subr.mxu0 0.0
        %409 = vmatpush1.xpose.msra.mxu0 0.0
        %410 = vmatprep.subr.mxu0 0.0
        %411 = vmatpush1.xpose.msra.mxu0 0.0
        %412 = vmatprep.subr.mxu0 0.0
        %413 = vmatpush1.xpose.msra.mxu0 0.0
        %414 = vmatprep.subr.mxu0 0.0
        %415 = vmatpush1.xpose.msra.mxu0 0.0
        %416 = vmatprep.subr.mxu0 0.0
        %417 = vmatpush1.xpose.msra.mxu0 0.0
        %418 = vmatprep.subr.mxu0 0.0
        %419 = vmatpush1.xpose.msra.mxu0 0.0
        %420 = vmatprep.subr.mxu0 0.0
        %421 = vmatpush1.xpose.msra.mxu0 0.0
        %422 = vmatprep.subr.mxu0 0.0
        %423 = vmatpush1.xpose.msra.mxu0 0.0
        %424 = vmatprep.subr.mxu0 0.0
        %425 = vmatpush1.xpose.msra.mxu0 0.0
        %426 = vmatprep.subr.mxu0 0.0
        %427 = vmatpush1.xpose.msra.mxu0 0.0
        %428 = vmatprep.mubr.f32.mxu0 0.0
        %429 = vmatmul.mubr.f32.gmra.mrb[0].mxu0 %v338
        %v430 = vpop.f32.mrb[0].mxu0
        %v431 = vadd.f32 0.0, %v430
        %v432 = vpop.f32.mrb[0].mxu0
        %433 = vdwg.mxu0
        %v434 = vpack.c.bf16 %v308, %v305
        %v435 = vpack.c.bf16 %v316, %v313
        %v436 = vpack.c.bf16 %v324, %v321
        %v437 = vpack.c.bf16 %v332, %v329
        %v442 = vunpack.c.l.b16 %v434
        %v443 = vunpack.c.h.b16 %v434
        %v444 = vunpack.c.l.b16 %v435
        %v445 = vunpack.c.h.b16 %v435
        %v446 = vunpack.c.l.b16 %v436
        %v447 = vunpack.c.h.b16 %v436
        %v448 = vunpack.c.l.b16 %v437
        %v449 = vunpack.c.h.b16 %v437
        %v450 = vpack.c.b16 %v442, %v442
        %v451 = vpack.c.b16 %v443, %v443
        %v452 = vpack.c.b16 %v444, %v444
        %v453 = vpack.c.b16 %v445, %v445
        %v454 = vpack.c.b16 %v446, %v446
        %v455 = vpack.c.b16 %v447, %v447
        %v456 = vpack.c.b16 %v448, %v448
        %v457 = vpack.c.b16 %v449, %v449
        %vm466 = vcmask 125952
        %467 = vst.msk [vmem:[%s222] sm:$0xf] %vm466, %v450
        %468 = vst.msk [vmem:[%s222 + $0x4] sm:$0xf] %vm466, %v451
        %469 = vst.msk [vmem:[%s222 + $0x8] sm:$0xf] %vm466, %v452
        %470 = vst.msk [vmem:[%s222 + $0xc] sm:$0xf] %vm466, %v453
        %471 = vst.msk [vmem:[%s222 + $0x10] sm:$0xf] %vm466, %v454
        %472 = vst.msk [vmem:[%s222 + $0x14] sm:$0xf] %vm466, %v455
        %473 = vst.msk [vmem:[%s222 + $0x18] sm:$0xf] %vm466, %v456
        %474 = vst.msk [vmem:[%s222 + $0x1c] sm:$0xf] %vm466, %v457
        %vm475 = vcmask 517120
        %476 = vst.msk [vmem:[%s209] sm:$0x3] %vm475, %v431
        %p477 = scmp.lt.s32.totalorder %s19, 1
        %s478 = scalar_select %p477, %s19, 1
        %s479 = smul.addr %s478, 8
        %s480 = smul.addr %s479, 4
        %s481 = scalar_lea.vmem %s3, %s480
        %s482 = sand.u32 %s126, 1
        %s483 = scalar_lea.sflag [#allocation3], %s482
        %s484 = sand.u32 %s126, 1
        %s485 = smul.addr %s484, 2
        %s486 = scalar_lea.vmem [#allocation2], %s485
        // Predicated region
        $region33: #{tpu_custom_call.1} parent=31 // pred_check
          %p487 = pneg %p110
        $region34: #{tpu_custom_call.1} parent=31 // pred_check_branch
          %489 = sbr.rel (%p487) target = $region36
        $region35: #{tpu_custom_call.1} parent=31 // pred_region
          _
        $region36: #{tpu_custom_call.1} parent=31 // pred_fallthru
          _
        // Predicated region
        $region37: #{tpu_custom_call.1} parent=31 // pred_check
          %p490 = pneg %p136
        $region38: #{tpu_custom_call.1} parent=31 // pred_check_branch
          %492 = sbr.rel (%p490) target = $region40
        $region39: #{tpu_custom_call.1} parent=31 // pred_region
          %s494 = ssub.s32 32, 32
          %495 = vsyncadd %s483, %s494
          %s496 = smul.addr %s19, 32
          %s497 = scalar_lea.hbm %s4, %s496
          %s499 = sshll.u32 %s486, 4
          %s500 = int_to_ptr.vmem [resolvable:$true] %s499
          %502 = dma.vmem_to_hbm [thread:$0]  %s500, 32, %s497, %s483
        $region40: #{tpu_custom_call.1} parent=31 // pred_fallthru
          _
      $region32: #{tpu_custom_call.1} parent=5 // pred_fallthru
        _
      %p503 = scmp.le.s32.totalorder 2, %s14
      // Predicated region
      $region41: #{tpu_custom_call.1} parent=5 // pred_check
        %p504 = pneg %p503
      $region42: #{tpu_custom_call.1} parent=5 // pred_check_branch
        %506 = sbr.rel (%p504) target = $region44
      $region43: #{tpu_custom_call.1} parent=5 // pred_region
        %s507 = ssub.s32 %s14, 2
        // Predicated region
        $region45: #{tpu_custom_call.1} parent=43 // pred_check
          %p508 = pneg %p116
        $region46: #{tpu_custom_call.1} parent=43 // pred_check_branch
          %510 = sbr.rel (%p508) target = $region48
        $region47: #{tpu_custom_call.1} parent=43 // pred_region
          %p511 = scmp.lt.s32.totalorder %s20, 1
          %s512 = scalar_select %p511, %s20, 1
          %s513 = smul.addr %s512, 8
          %s514 = smul.addr %s513, 4
          %s515 = scalar_lea.vmem %s3, %s514
        $region48: #{tpu_custom_call.1} parent=43 // pred_fallthru
          _
        // Predicated region
        $region49: #{tpu_custom_call.1} parent=43 // pred_check
          %p516 = pneg %p142
        $region50: #{tpu_custom_call.1} parent=43 // pred_check_branch
          %518 = sbr.rel (%p516) target = $region52
        $region51: #{tpu_custom_call.1} parent=43 // pred_region
          %s519 = sand.u32 %s127, 1
          %s520 = scalar_lea.sflag [#allocation3], %s519
          %s521 = sand.u32 %s127, 1
          %s522 = smul.addr %s521, 2
          %s523 = scalar_lea.vmem [#allocation2], %s522
          %524 = dma.done %s520, 32
        $region52: #{tpu_custom_call.1} parent=43 // pred_fallthru
          _
      $region44: #{tpu_custom_call.1} parent=5 // pred_fallthru
        _
    $region6: #{tpu_custom_call.1} parent=1 // loop_footer
      %s18 = sadd.s32 1, %s14
    $region7: #{tpu_custom_call.1} parent=1 // loop_footer_branch
      %13 = sbr.rel target = $region3
    $region8: #{tpu_custom_call.1} parent=1 // loop_exit
      _
    %525 = vsyncpa [#allocation3], 1
    %s526 = scalar_lea.sflag [#allocation3], 1
    %527 = vsyncpa %s526, 1

</llo_original>
